<compile_context>
chip_gen: v7x
topology: tpu7x:2x2x1
jax: 0.10.0
libtpu: 0.0.40
codegen_flags: <defaults>
</compile_context>

<pallas_src>
import jax
import jax.numpy as jnp
import numpy as np
from jax import lax
from jax.experimental import pallas as pl
from jax.experimental.pallas import tpu as pltpu

TWO_PI = 2.0 * np.pi


# ----------------------------------------------------------------------------
# Kernel: whole T-step recurrence in one invocation.
# ----------------------------------------------------------------------------
def scm_fused_kernel(xs_ref, state0_ref, trans_ref, resv_ref,
                     alphas_ref, ksc_ref, omegas_ref,
                     out_ref, xproj_scr):
    """xs_ref: (T*B, P); state0_ref: (B, R); out_ref: (T*B, R)."""
    TB, _ = xs_ref.shape
    B, R = state0_ref.shape
    T = TB // B                     # static Python int (shapes are static)

    # --- Prologue: hoisted, state-independent input projection (one matmul,
    # M = T*B rows -> full MXU row occupancy) into a VMEM scratch slab.
    xproj_scr[...] = jnp.dot(xs_ref[...], trans_ref[...],
                             preferred_element_type=jnp.float32)

    # --- Loop-invariant operands, hoisted out of the unrolled time loop.
    resv = resv_ref[...]                                   # (R, R), 0/1 adjacency
    alphas_b = jnp.broadcast_to(alphas_ref[...], (B, R))
    ksc_b = jnp.broadcast_to(ksc_ref[...], (B, R))         # ks / (2*pi)
    omegas_b = jnp.broadcast_to(omegas_ref[...], (B, R))

    def step(t, state):
        row = pl.multiple_of(t * B, B)                     # sublane-aligned
        # driven_state = state + x_t @ transition (projection precomputed)
        driven = state + xproj_scr[pl.ds(row, B), :]

        # Global min/max normalization, kept in the reference op order.
        # NOTE: like the torch reference, NaN/Inf if dsmax == dsmin.
        dsmax = jnp.max(driven)
        dsmin = jnp.min(driven)
        driven = (driven - dsmin) / (dsmax - dsmin)

        # thetas = driven @ reservoir (dense: Watts-Strogatz graph is rewired,
        # not a pure ring, so no roll shortcut).
        thetas = jnp.dot(driven, resv, preferred_element_type=jnp.float32)

        # tensor_scm: alphas*thetas + omegas + (ks/2pi) * sin(2pi*thetas)
        thetas = (alphas_b * thetas + omegas_b
                  + ksc_b * jnp.sin(TWO_PI * thetas))

        out_ref[pl.ds(row, B), :] = thetas
        return thetas                                      # output -> next state

    # State carried in registers across the unrolled time loop.
    lax.fori_loop(0, T, step, state0_ref[...], unroll=True)


# ----------------------------------------------------------------------------
# Wrappers
# ----------------------------------------------------------------------------
def scm_sequence_forward(xs, state0, transition, reservoir, alphas, ks, omegas):
    """Fused multi-timestep SCM forward.

    xs: (T, B, prev_size), state0: (B, R). Returns (T, B, R) per-step outputs.
    Single pallas_call, no grid: everything VMEM-resident, one writeback DMA.
    """
    T, B, P = xs.shape
    R = state0.shape[1]
    f32 = jnp.float32

    xs2 = jnp.asarray(xs, f32).reshape(T * B, P)
    ks_scaled = (jnp.asarray(ks, f32) / TWO_PI).reshape(1, R)   # hoisted prep

    out = pl.pallas_call(
        scm_fused_kernel,
        out_shape=jax.ShapeDtypeStruct((T * B, R), f32),
        scratch_shapes=[pltpu.VMEM((T * B, R), f32)],   # hoisted x @ transition
    )(
        xs2,
        jnp.asarray(state0, f32),
        jnp.asarray(transition, f32),
        jnp.asarray(reservoir, f32),
        jnp.asarray(alphas, f32).reshape(1, R),
        ks_scaled,
        jnp.asarray(omegas, f32).reshape(1, R),
    )
    return out.reshape(T, B, R)


def scm_layer_forward(x, state, transition, reservoir, alphas, ks, omegas):
    """Exact SCMLayer.forward (single step) = T==1 case of the fused kernel."""
    out = scm_sequence_forward(x[None, ...], state, transition, reservoir,
                               alphas, ks, omegas)
    return out[0]


# ----------------------------------------------------------------------------
# Deterministic Watts-Strogatz-style adjacency (stand-in for networkx)
# ----------------------------------------------------------------------------
def make_watts_strogatz_reservoir(n: int, k: int = 3, p: float = 0.5,
                                  seed: int = 0) -> jnp.ndarray:
    """Mirrors nx.watts_strogatz_graph(n, k, p): ring lattice with k//2
    neighbours on each side, then each rightward edge rewired with prob p.
    Deterministic (numpy RNG) so this script is reproducible without networkx."""
    rng = np.random.default_rng(seed)
    half = k // 2
    adj = np.zeros((n, n), dtype=np.float64)
    for j in range(1, half + 1):              # ring lattice
        for u in range(n):
            v = (u + j) % n
            adj[u, v] = adj[v, u] = 1.0
    for j in range(1, half + 1):              # rewire
        for u in range(n):
            v = (u + j) % n
            if rng.random() < p:
                w = int(rng.integers(0, n))
                while w == u or adj[u, w] == 1.0:
                    w = int(rng.integers(0, n))
                adj[u, v] = adj[v, u] = 0.0
                adj[u, w] = adj[w, u] = 1.0
    return jnp.asarray(adj, dtype=jnp.float32)


# ----------------------------------------------------------------------------
# Pure-JAX references (straight port of the torch forward)
# ----------------------------------------------------------------------------
def reference_step(x, state, transition, reservoir, alphas, ks, omegas):
    driven = state + x @ transition
    dsmax = jnp.max(driven)
    dsmin = jnp.min(driven)
    driven = (driven - dsmin) / (dsmax - dsmin)
    thetas = driven @ reservoir
    return (alphas * thetas + omegas
            + (ks / TWO_PI) * jnp.sin(TWO_PI * thetas))


def reference_sequence(xs, state0, transition, reservoir, alphas, ks, omegas):
    outs = []
    state = state0
    for t in range(xs.shape[0]):
        thetas = reference_step(xs[t], state, transition, reservoir,
                                alphas, ks, omegas)
        outs.append(thetas)
        state = thetas
    return jnp.stack(outs, axis=0)


# ----------------------------------------------------------------------------
# Demo / correctness check
# ----------------------------------------------------------------------------
if __name__ == "__main__":
    T = 16             # timesteps fused into one pallas_call
    B = 8              # batch
    PREV = 32          # prev_size
    R = 128            # reservoir_size

    key = jax.random.PRNGKey(0)
    k_x, k_s, k_a, k_k, k_o = jax.random.split(key, 5)

    xs = jax.random.normal(k_x, (T, B, PREV), dtype=jnp.float32)
    state0 = jax.random.normal(k_s, (B, R), dtype=jnp.float32)

    # transition defaults to ones(prev_size, reservoir_size) in __init__
    transition = jnp.ones((PREV, R), dtype=jnp.float32)
    reservoir = make_watts_strogatz_reservoir(R, k=3, p=0.5, seed=0)

    # nn.Parameter(torch.rand(reservoir_size)) -> uniform [0, 1)
    alphas = jax.random.uniform(k_a, (R,), dtype=jnp.float32)
    ks = jax.random.uniform(k_k, (R,), dtype=jnp.float32)
    omegas = jax.random.uniform(k_o, (R,), dtype=jnp.float32)

    # --- single-step SCMLayer.forward semantics ---
    out1 = scm_layer_forward(xs[0], state0, transition, reservoir,
                             alphas, ks, omegas)
    out1 = jax.block_until_ready(out1)
    ref1 = reference_step(xs[0], state0, transition, reservoir,
                          alphas, ks, omegas)
    assert out1.shape == (B, R)
    np.testing.assert_allclose(np.asarray(out1), np.asarray(ref1),
                               rtol=2e-4, atol=2e-4)

    # --- fused T-step recurrence in one kernel ---
    out_seq = scm_sequence_forward(xs, state0, transition, reservoir,
                                   alphas, ks, omegas)
    out_seq = jax.block_until_ready(out_seq)
    ref_seq = reference_sequence(xs, state0, transition, reservoir,
                                 alphas, ks, omegas)
    assert out_seq.shape == (T, B, R)
    # f32 error compounds slightly through the 16-step recurrence.
    np.testing.assert_allclose(np.asarray(out_seq), np.asarray(ref_seq),
                               rtol=5e-4, atol=5e-4)

    print("KERNEL_OK")
</pallas_src>

<mosaic_0001>
module attributes {stable_mosaic.version = 11 : i64} {
  func.func @scm_fused_kernel(%arg0: memref<8x32xf32, #tpu.memory_space<vmem>>, %arg1: memref<8x128xf32, #tpu.memory_space<vmem>>, %arg2: memref<32x128xf32, #tpu.memory_space<vmem>>, %arg3: memref<128x128xf32, #tpu.memory_space<vmem>>, %arg4: memref<1x128xf32, #tpu.memory_space<vmem>>, %arg5: memref<1x128xf32, #tpu.memory_space<vmem>>, %arg6: memref<1x128xf32, #tpu.memory_space<vmem>>, %arg7: memref<8x128xf32, #tpu.memory_space<vmem>>, %arg8: memref<8x128xf32, #tpu.memory_space<vmem>>) attributes {dimension_semantics = [], scalar_prefetch = 0 : i64, scratch_operands = 1 : i64, tpu.core_type = #tpu.core_type<tc>} {
    %c0 = arith.constant 0 : index
    %c0_0 = arith.constant 0 : index
    %0 = vector.load %arg0[%c0, %c0_0] : memref<8x32xf32, #tpu.memory_space<vmem>>, vector<8x32xf32>
    %c0_1 = arith.constant 0 : index
    %c0_2 = arith.constant 0 : index
    %1 = vector.load %arg2[%c0_1, %c0_2] : memref<32x128xf32, #tpu.memory_space<vmem>>, vector<32x128xf32>
    %cst = arith.constant dense<0.000000e+00> : vector<8x128xf32>
    %2 = tpu.matmul %0, %1, %cst {dimension_numbers = #tpu.dot_dimension_numbers<[1], [0], [0], [1], [0, 0, 1, 1], [], []>} : vector<8x32xf32>, vector<32x128xf32>, vector<8x128xf32> -> vector<8x128xf32>
    %c0_3 = arith.constant 0 : index
    %c0_4 = arith.constant 0 : index
    %3 = vector.load %arg8[%c0_3, %c0_4] : memref<8x128xf32, #tpu.memory_space<vmem>>, vector<8x128xf32>
    tpu.vector_store %arg8[%c0_3, %c0_4], %2 {strides = array<i32>} : memref<8x128xf32, #tpu.memory_space<vmem>>, vector<8x128xf32>,
    %c0_5 = arith.constant 0 : index
    %c0_6 = arith.constant 0 : index
    %4 = vector.load %arg3[%c0_5, %c0_6] : memref<128x128xf32, #tpu.memory_space<vmem>>, vector<128x128xf32>
    %c0_7 = arith.constant 0 : index
    %c0_8 = arith.constant 0 : index
    %5 = vector.load %arg4[%c0_7, %c0_8] : memref<1x128xf32, #tpu.memory_space<vmem>>, vector<1x128xf32>
    %6 = vector.shape_cast %5 : vector<1x128xf32> to vector<1x128xf32>
    %7 = vector.broadcast %6 : vector<1x128xf32> to vector<8x128xf32>
    %c0_9 = arith.constant 0 : index
    %c0_10 = arith.constant 0 : index
    %8 = vector.load %arg5[%c0_9, %c0_10] : memref<1x128xf32, #tpu.memory_space<vmem>>, vector<1x128xf32>
    %9 = vector.shape_cast %8 : vector<1x128xf32> to vector<1x128xf32>
    %10 = vector.broadcast %9 : vector<1x128xf32> to vector<8x128xf32>
    %c0_11 = arith.constant 0 : index
    %c0_12 = arith.constant 0 : index
    %11 = vector.load %arg6[%c0_11, %c0_12] : memref<1x128xf32, #tpu.memory_space<vmem>>, vector<1x128xf32>
    %12 = vector.shape_cast %11 : vector<1x128xf32> to vector<1x128xf32>
    %13 = vector.broadcast %12 : vector<1x128xf32> to vector<8x128xf32>
    %c0_13 = arith.constant 0 : index
    %c0_14 = arith.constant 0 : index
    %14 = vector.load %arg1[%c0_13, %c0_14] : memref<8x128xf32, #tpu.memory_space<vmem>>, vector<8x128xf32>
    %c0_i32 = arith.constant 0 : i32
    %c8_i32 = arith.constant 8 : i32
    %15 = arith.muli %c0_i32, %c8_i32 : i32
    %16 = tpu.assume_multiple %15, 8 : i32
    %17 = arith.index_cast %16 : i32 to index
    %c0_15 = arith.constant 0 : index
    %18 = vector.load %arg8[%17, %c0_15] : memref<8x128xf32, #tpu.memory_space<vmem>>, vector<8x128xf32>
    %19 = arith.addf %14, %18 : vector<8x128xf32>
    %20 = vector.shape_cast %19 : vector<8x128xf32> to vector<1x8x128xf32>
    %cst_16 = arith.constant dense<0xFF800000> : vector<1xf32>
    %21 = vector.multi_reduction <maximumf>, %20, %cst_16 [1, 2] : vector<1x8x128xf32> to vector<1xf32>
    %22 = vector.shape_cast %21 : vector<1xf32> to vector<1x1x1xf32>
    %23 = vector.extract %22[0, 0, 0] : f32 from vector<1x1x1xf32>
    %24 = vector.shape_cast %19 : vector<8x128xf32> to vector<1x8x128xf32>
    %cst_17 = arith.constant dense<0x7F800000> : vector<1xf32>
    %25 = vector.multi_reduction <minimumf>, %24, %cst_17 [1, 2] : vector<1x8x128xf32> to vector<1xf32>
    %26 = vector.shape_cast %25 : vector<1xf32> to vector<1x1x1xf32>
    %27 = vector.extract %26[0, 0, 0] : f32 from vector<1x1x1xf32>
    %28 = vector.broadcast %27 : f32 to vector<8x128xf32>
    %29 = arith.subf %19, %28 : vector<8x128xf32>
    %30 = arith.subf %23, %27 : f32
    %31 = vector.broadcast %30 : f32 to vector<8x128xf32>
    %32 = arith.divf %29, %31 : vector<8x128xf32>
    %cst_18 = arith.constant dense<0.000000e+00> : vector<8x128xf32>
    %33 = tpu.matmul %32, %4, %cst_18 {dimension_numbers = #tpu.dot_dimension_numbers<[1], [0], [0], [1], [0, 0, 1, 1], [], []>} : vector<8x128xf32>, vector<128x128xf32>, vector<8x128xf32> -> vector<8x128xf32>
    %34 = arith.mulf %7, %33 : vector<8x128xf32>
    %35 = arith.addf %34, %13 : vector<8x128xf32>
    %cst_19 = arith.constant 6.28318548 : f32
    %36 = vector.broadcast %cst_19 : f32 to vector<8x128xf32>
    %37 = arith.mulf %36, %33 : vector<8x128xf32>
    %38 = math.sin %37 : vector<8x128xf32>
    %39 = arith.mulf %10, %38 : vector<8x128xf32>
    %40 = arith.addf %35, %39 : vector<8x128xf32>
    %41 = arith.index_cast %16 : i32 to index
    %c0_20 = arith.constant 0 : index
    %42 = vector.load %arg7[%41, %c0_20] : memref<8x128xf32, #tpu.memory_space<vmem>>, vector<8x128xf32>
    tpu.vector_store %arg7[%41, %c0_20], %40 {strides = array<i32>} : memref<8x128xf32, #tpu.memory_space<vmem>>, vector<8x128xf32>,
    %c1_i32 = arith.constant 1 : i32
    return
  }
}

</mosaic_0001>

<llo_original>
// kernel: tpu_custom_call.1
$region0: #{tpu_custom_call.1}
  #allocation0 [shape = 'u32[]', space=smem, size = 0x4, offset = 0x4, fixed_abs, tag = 'smem constant byte address 0x4 - core index']
  #allocation1 [shape = 'u32[144,128]{1,0:T(1,128)}', space=vmem, size = 0x12000, scoped, tag = 'internal scratch']
  #allocation2 [shape = 'f32[8,128]{1,0:T(8,128)}', space=vmem, size = 0x1000, scoped, tag = 'scratch operand']
  %s0 = inlined_call_operand.hbm [shape: f32[8,32], index: 0, kind: input, shape index: {}]
  %s1 = inlined_call_operand.hbm [shape: f32[8,128], index: 1, kind: input, shape index: {}]
  %s2 = inlined_call_operand.hbm [shape: f32[32,128], index: 2, kind: input, shape index: {}]
  %s3 = inlined_call_operand.hbm [shape: f32[128,128], index: 3, kind: input, shape index: {}]
  %s4 = inlined_call_operand.vmem [shape: f32[1,128], index: 4, kind: input, shape index: {}]
  %s5 = inlined_call_operand.vmem [shape: f32[1,128], index: 5, kind: input, shape index: {}]
  %s6 = inlined_call_operand.vmem [shape: f32[1,128], index: 6, kind: input, shape index: {}]
  %s7 = inlined_call_operand.hbm [shape: f32[8,128], index: 7, kind: output, shape index: {}]
  %s8 = sld [smem:[#allocation0]]
  $region54: #{tpu_custom_call.1} parent=0
    _
  %s10 = ssub.s32 1, %s8
  %s11 = scalar_select 0, %s10, %s8
  $region1: #{tpu_custom_call.1} parent=0
    #allocation3 [shape = 'u8[4096]{0}', space=vmem, size = 0x1000, scoped, tag = 'input window, operand 0, single buffered']
    #allocation4 [shape = 's32[1]{0}', space=sflag, size = 0x4, scoped, tag = 'scoped memory for tpu_custom_call.1']
    #allocation5 [shape = 's32[1]{0}', space=sflag, size = 0x4, scoped, tag = 'scoped memory for tpu_custom_call.1']
    #allocation6 [shape = 'u8[4096]{0}', space=vmem, size = 0x1000, scoped, tag = 'input window, operand 1, single buffered']
    #allocation7 [shape = 's32[1]{0}', space=sflag, size = 0x4, scoped, tag = 'scoped memory for tpu_custom_call.1']
    #allocation8 [shape = 'u8[16384]{0}', space=vmem, size = 0x4000, scoped, tag = 'input window, operand 2, single buffered']
    #allocation9 [shape = 'u8[65536]{0}', space=vmem, size = 0x10000, scoped, tag = 'input window, operand 3, single buffered']
    #allocation10 [shape = 's32[1]{0}', space=sflag, size = 0x4, scoped, tag = 'scoped memory for tpu_custom_call.1']
    #allocation11 [shape = 'u8[4096]{0}', space=vmem, size = 0x1000, scoped, tag = 'output window, operand 0, single buffered']
    %12 = vsyncpa [#allocation4], 0
    %13 = vsyncpa [#allocation7], 0
    %14 = vsyncpa [#allocation10], 0
    %15 = vsyncpa [#allocation5], 0
    // Predicated region
    $region2: #{tpu_custom_call.1} parent=1 // pred_check
      _
    $region3: #{tpu_custom_call.1} parent=1 // pred_check_branch
      %17 = sbr.rel (0) target = $region5
    $region4: #{tpu_custom_call.1} parent=1 // pred_region
      %s19 = ssub.s32 128, 128
      %20 = vsyncadd [#allocation4], %s19
      %s22 = sshll.u32 [#allocation3], 4
      %s23 = int_to_ptr.vmem [resolvable:$true] %s22
      %25 = dma.hbm_to_vmem [thread:$0]  %s0, 128, %s23, [#allocation4]
    $region5: #{tpu_custom_call.1} parent=1 // pred_fallthru
      _
    // Predicated region
    $region6: #{tpu_custom_call.1} parent=1 // pred_check
      _
    $region7: #{tpu_custom_call.1} parent=1 // pred_check_branch
      %27 = sbr.rel (0) target = $region9
    $region8: #{tpu_custom_call.1} parent=1 // pred_region
      %s29 = ssub.s32 128, 128
      %30 = vsyncadd [#allocation7], %s29
      %s32 = sshll.u32 [#allocation6], 4
      %s33 = int_to_ptr.vmem [resolvable:$true] %s32
      %35 = dma.hbm_to_vmem [thread:$0]  %s1, 128, %s33, [#allocation7]
    $region9: #{tpu_custom_call.1} parent=1 // pred_fallthru
      _
    // Predicated region
    $region10: #{tpu_custom_call.1} parent=1 // pred_check
      _
    $region11: #{tpu_custom_call.1} parent=1 // pred_check_branch
      %37 = sbr.rel (0) target = $region13
    $region12: #{tpu_custom_call.1} parent=1 // pred_region
      %s39 = ssub.s32 512, 512
      %40 = vsyncadd [#allocation7], %s39
      %s41 = sshll.u32 [#allocation8], 4
      %s42 = int_to_ptr.vmem [resolvable:$true] %s41
      %47 = dma.hbm_to_vmem [thread:$0]  %s2, 512, %s42, [#allocation7], 128, 128, 8
    $region13: #{tpu_custom_call.1} parent=1 // pred_fallthru
      _
    // Predicated region
    $region14: #{tpu_custom_call.1} parent=1 // pred_check
      _
    $region15: #{tpu_custom_call.1} parent=1 // pred_check_branch
      %49 = sbr.rel (0) target = $region17
    $region16: #{tpu_custom_call.1} parent=1 // pred_region
      %s51 = ssub.s32 2048, 2048
      %52 = vsyncadd [#allocation10], %s51
      %s53 = sshll.u32 [#allocation9], 4
      %s54 = int_to_ptr.vmem [resolvable:$true] %s53
      %59 = dma.hbm_to_vmem [thread:$0]  %s3, 2048, %s54, [#allocation10], 128, 128, 8
    $region17: #{tpu_custom_call.1} parent=1 // pred_fallthru
      _
    // Predicated region
    $region18: #{tpu_custom_call.1} parent=1 // pred_check
      _
    $region19: #{tpu_custom_call.1} parent=1 // pred_check_branch
      %61 = sbr.rel (0) target = $region21
    $region20: #{tpu_custom_call.1} parent=1 // pred_region
      _
    $region21: #{tpu_custom_call.1} parent=1 // pred_fallthru
      _
    // Predicated region
    $region22: #{tpu_custom_call.1} parent=1 // pred_check
      _
    $region23: #{tpu_custom_call.1} parent=1 // pred_check_branch
      %63 = sbr.rel (0) target = $region25
    $region24: #{tpu_custom_call.1} parent=1 // pred_region
      _
    $region25: #{tpu_custom_call.1} parent=1 // pred_fallthru
      _
    // Predicated region
    $region26: #{tpu_custom_call.1} parent=1 // pred_check
      _
    $region27: #{tpu_custom_call.1} parent=1 // pred_check_branch
      %65 = sbr.rel (0) target = $region29
    $region28: #{tpu_custom_call.1} parent=1 // pred_region
      _
    $region29: #{tpu_custom_call.1} parent=1 // pred_fallthru
      _
    // Predicated region
    $region30: #{tpu_custom_call.1} parent=1 // pred_check
      _
    $region31: #{tpu_custom_call.1} parent=1 // pred_check_branch
      %67 = sbr.rel (0) target = $region33
    $region32: #{tpu_custom_call.1} parent=1 // pred_region
      %68 = dma.done [#allocation4], 128
    $region33: #{tpu_custom_call.1} parent=1 // pred_fallthru
      _
    // Predicated region
    $region34: #{tpu_custom_call.1} parent=1 // pred_check
      _
    $region35: #{tpu_custom_call.1} parent=1 // pred_check_branch
      %70 = sbr.rel (0) target = $region37
    $region36: #{tpu_custom_call.1} parent=1 // pred_region
      %71 = dma.done [#allocation7], 128
    $region37: #{tpu_custom_call.1} parent=1 // pred_fallthru
      _
    // Predicated region
    $region38: #{tpu_custom_call.1} parent=1 // pred_check
      _
    $region39: #{tpu_custom_call.1} parent=1 // pred_check_branch
      %73 = sbr.rel (0) target = $region41
    $region40: #{tpu_custom_call.1} parent=1 // pred_region
      %74 = dma.done [#allocation7], 512
    $region41: #{tpu_custom_call.1} parent=1 // pred_fallthru
      _
    // Predicated region
    $region42: #{tpu_custom_call.1} parent=1 // pred_check
      _
    $region43: #{tpu_custom_call.1} parent=1 // pred_check_branch
      %76 = sbr.rel (0) target = $region45
    $region44: #{tpu_custom_call.1} parent=1 // pred_region
      %77 = dma.done [#allocation10], 2048
    $region45: #{tpu_custom_call.1} parent=1 // pred_fallthru
      _
    %v78 = vld [vmem:[#allocation3] sm:$0xff]
    %v79 = vld [vmem:[#allocation8] sm:$0xff]
    %v80 = vld [vmem:[#allocation8 + $0x8] sm:$0xff]
    %v81 = vld [vmem:[#allocation8 + $0x10] sm:$0xff]
    %v82 = vld [vmem:[#allocation8 + $0x18] sm:$0xff]
    %vm83 = vcmask 261120
    %v85 = vsel %vm83, %v78, 0
    %87 = vmatprep.subr.mxu0 0.0
    %88 = vmatpush1.msra.mxu0 %v79
    %89 = vmatprep.subr.mxu0 0.0
    %90 = vmatpush1.msra.mxu0 %v80
    %91 = vmatprep.subr.mxu0 0.0
    %92 = vmatpush1.msra.mxu0 %v81
    %93 = vmatprep.subr.mxu0 0.0
    %94 = vmatpush1.msra.mxu0 %v82
    %95 = vmatprep.subr.mxu0 0.0
    %96 = vmatpush1.msra.mxu0 0.0
    %97 = vmatprep.subr.mxu0 0.0
    %98 = vmatpush1.msra.mxu0 0.0
    %99 = vmatprep.subr.mxu0 0.0
    %100 = vmatpush1.msra.mxu0 0.0
    %101 = vmatprep.subr.mxu0 0.0
    %102 = vmatpush1.msra.mxu0 0.0
    %103 = vmatprep.subr.mxu0 0.0
    %104 = vmatpush1.msra.mxu0 0.0
    %105 = vmatprep.subr.mxu0 0.0
    %106 = vmatpush1.msra.mxu0 0.0
    %107 = vmatprep.subr.mxu0 0.0
    %108 = vmatpush1.msra.mxu0 0.0
    %109 = vmatprep.subr.mxu0 0.0
    %110 = vmatpush1.msra.mxu0 0.0
    %111 = vmatprep.subr.mxu0 0.0
    %112 = vmatpush1.msra.mxu0 0.0
    %113 = vmatprep.subr.mxu0 0.0
    %114 = vmatpush1.msra.mxu0 0.0
    %115 = vmatprep.subr.mxu0 0.0
    %116 = vmatpush1.msra.mxu0 0.0
    %117 = vmatprep.subr.mxu0 0.0
    %118 = vmatpush1.msra.mxu0 0.0
    %119 = vmatprep.subr.mxu0 0.0
    %120 = vmatpush1.msra.mxu0 0.0
    %121 = vmatprep.subr.mxu0 0.0
    %122 = vmatpush1.msra.mxu0 0.0
    %123 = vmatprep.subr.mxu0 0.0
    %124 = vmatpush1.msra.mxu0 0.0
    %125 = vmatprep.subr.mxu0 0.0
    %126 = vmatpush1.msra.mxu0 0.0
    %127 = vmatprep.subr.mxu0 0.0
    %128 = vmatpush1.msra.mxu0 0.0
    %129 = vmatprep.subr.mxu0 0.0
    %130 = vmatpush1.msra.mxu0 0.0
    %131 = vmatprep.subr.mxu0 0.0
    %132 = vmatpush1.msra.mxu0 0.0
    %133 = vmatprep.subr.mxu0 0.0
    %134 = vmatpush1.msra.mxu0 0.0
    %135 = vmatprep.subr.mxu0 0.0
    %136 = vmatpush1.msra.mxu0 0.0
    %137 = vmatprep.subr.mxu0 0.0
    %138 = vmatpush1.msra.mxu0 0.0
    %139 = vmatprep.subr.mxu0 0.0
    %140 = vmatpush1.msra.mxu0 0.0
    %141 = vmatprep.subr.mxu0 0.0
    %142 = vmatpush1.msra.mxu0 0.0
    %143 = vmatprep.subr.mxu0 0.0
    %144 = vmatpush1.msra.mxu0 0.0
    %145 = vmatprep.subr.mxu0 0.0
    %146 = vmatpush1.msra.mxu0 0.0
    %147 = vmatprep.subr.mxu0 0.0
    %148 = vmatpush1.msra.mxu0 0.0
    %149 = vmatprep.subr.mxu0 0.0
    %150 = vmatpush1.msra.mxu0 0.0
    %151 = vmatprep.mubr.f32.mxu0 0.0
    %152 = vmatmul.mubr.f32.gmra.mrb[0].mxu0 %v85
    %v153 = vpop.f32.mrb[0].mxu0
    %v154 = vadd.f32 0.0, %v153
    %v155 = vpop.f32.mrb[0].mxu0
    %156 = vdwg.mxu0
    %157 = vst [vmem:[#allocation2] sm:$0xff] %v154
    %v158 = vld [vmem:[#allocation9] sm:$0xff]
    %v159 = vld [vmem:[#allocation9 + $0x8] sm:$0xff]
    %v160 = vld [vmem:[#allocation9 + $0x10] sm:$0xff]
    %v161 = vld [vmem:[#allocation9 + $0x18] sm:$0xff]
    %v162 = vld [vmem:[#allocation9 + $0x20] sm:$0xff]
    %v163 = vld [vmem:[#allocation9 + $0x28] sm:$0xff]
    %v164 = vld [vmem:[#allocation9 + $0x30] sm:$0xff]
    %v165 = vld [vmem:[#allocation9 + $0x38] sm:$0xff]
    %v166 = vld [vmem:[#allocation9 + $0x40] sm:$0xff]
    %v167 = vld [vmem:[#allocation9 + $0x48] sm:$0xff]
    %v168 = vld [vmem:[#allocation9 + $0x50] sm:$0xff]
    %v169 = vld [vmem:[#allocation9 + $0x58] sm:$0xff]
    %v170 = vld [vmem:[#allocation9 + $0x60] sm:$0xff]
    %v171 = vld [vmem:[#allocation9 + $0x68] sm:$0xff]
    %v172 = vld [vmem:[#allocation9 + $0x70] sm:$0xff]
    %v173 = vld [vmem:[#allocation9 + $0x78] sm:$0xff]
    %v174 = vld [vmem:[%s4] sm:$0x1]
    %v176 = vlaneseq
    %v177 = vshrl.u32 %v176, 7
    %v178 = vsub.s32 0, %v177
    %v179 = vrot.slane %v174, %v178
    %v181 = vld [vmem:[%s5] sm:$0x1]
    %v183 = vlaneseq
    %v184 = vshrl.u32 %v183, 7
    %v185 = vsub.s32 0, %v184
    %v186 = vrot.slane %v181, %v185
    %v188 = vld [vmem:[%s6] sm:$0x1]
    %v190 = vlaneseq
    %v191 = vshrl.u32 %v190, 7
    %v192 = vsub.s32 0, %v191
    %v193 = vrot.slane %v188, %v192
    %v195 = vld [vmem:[#allocation6] sm:$0xff]
    %v196 = vld [vmem:[#allocation2] sm:$0xff]
    %v197 = vadd.f32 %v195, %v196
    %198 = vmax.xlane.f32.xlu0 %v197
    %v199 = vpop.xlane.xlu0 %198
    %v200 = vrot.slane %v199, 4
    %v201 = vmax.f32 %v199, %v200
    %v202 = vrot.slane %v201, 2
    %v203 = vmax.f32 %v201, %v202
    %v204 = vrot.slane %v203, 1
    %v205 = vmax.f32 %v203, %v204
    %s206 = vtos %v205
    %207 = vmin.xlane.f32.xlu0 %v197
    %v208 = vpop.xlane.xlu0 %207
    %v209 = vrot.slane %v208, 4
    %v210 = vmin.f32 %v208, %v209
    %v211 = vrot.slane %v210, 2
    %v212 = vmin.f32 %v210, %v211
    %v213 = vrot.slane %v212, 1
    %v214 = vmin.f32 %v212, %v213
    %s215 = vtos %v214
    %v216 = vstv %s215
    %v217 = vsub.f32 %v197, %v216
    %s218 = ssub.f32 %s206, %s215
    %v219 = vstv %s218
    %v220 = vrcp.pop %v219
    %v221 = vmul.f32 %v217, %v220
    %222 = vmatprep.subr.mxu0 0.0
    %223 = vmatpush1.msra.mxu0 %v158
    %224 = vmatprep.subr.mxu0 0.0
    %225 = vmatpush1.msra.mxu0 %v159
    %226 = vmatprep.subr.mxu0 0.0
    %227 = vmatpush1.msra.mxu0 %v160
    %228 = vmatprep.subr.mxu0 0.0
    %229 = vmatpush1.msra.mxu0 %v161
    %230 = vmatprep.subr.mxu0 0.0
    %231 = vmatpush1.msra.mxu0 %v162
    %232 = vmatprep.subr.mxu0 0.0
    %233 = vmatpush1.msra.mxu0 %v163
    %234 = vmatprep.subr.mxu0 0.0
    %235 = vmatpush1.msra.mxu0 %v164
    %236 = vmatprep.subr.mxu0 0.0
    %237 = vmatpush1.msra.mxu0 %v165
    %238 = vmatprep.subr.mxu0 0.0
    %239 = vmatpush1.msra.mxu0 %v166
    %240 = vmatprep.subr.mxu0 0.0
    %241 = vmatpush1.msra.mxu0 %v167
    %242 = vmatprep.subr.mxu0 0.0
    %243 = vmatpush1.msra.mxu0 %v168
    %244 = vmatprep.subr.mxu0 0.0
    %245 = vmatpush1.msra.mxu0 %v169
    %246 = vmatprep.subr.mxu0 0.0
    %247 = vmatpush1.msra.mxu0 %v170
    %248 = vmatprep.subr.mxu0 0.0
    %249 = vmatpush1.msra.mxu0 %v171
    %250 = vmatprep.subr.mxu0 0.0
    %251 = vmatpush1.msra.mxu0 %v172
    %252 = vmatprep.subr.mxu0 0.0
    %253 = vmatpush1.msra.mxu0 %v173
    %254 = vmatprep.subr.mxu0 0.0
    %255 = vmatpush1.msra.mxu0 0.0
    %256 = vmatprep.subr.mxu0 0.0
    %257 = vmatpush1.msra.mxu0 0.0
    %258 = vmatprep.subr.mxu0 0.0
    %259 = vmatpush1.msra.mxu0 0.0
    %260 = vmatprep.subr.mxu0 0.0
    %261 = vmatpush1.msra.mxu0 0.0
    %262 = vmatprep.subr.mxu0 0.0
    %263 = vmatpush1.msra.mxu0 0.0
    %264 = vmatprep.subr.mxu0 0.0
    %265 = vmatpush1.msra.mxu0 0.0
    %266 = vmatprep.subr.mxu0 0.0
    %267 = vmatpush1.msra.mxu0 0.0
    %268 = vmatprep.subr.mxu0 0.0
    %269 = vmatpush1.msra.mxu0 0.0
    %270 = vmatprep.subr.mxu0 0.0
    %271 = vmatpush1.msra.mxu0 0.0
    %272 = vmatprep.subr.mxu0 0.0
    %273 = vmatpush1.msra.mxu0 0.0
    %274 = vmatprep.subr.mxu0 0.0
    %275 = vmatpush1.msra.mxu0 0.0
    %276 = vmatprep.subr.mxu0 0.0
    %277 = vmatpush1.msra.mxu0 0.0
    %278 = vmatprep.subr.mxu0 0.0
    %279 = vmatpush1.msra.mxu0 0.0
    %280 = vmatprep.subr.mxu0 0.0
    %281 = vmatpush1.msra.mxu0 0.0
    %282 = vmatprep.subr.mxu0 0.0
    %283 = vmatpush1.msra.mxu0 0.0
    %284 = vmatprep.subr.mxu0 0.0
    %285 = vmatpush1.msra.mxu0 0.0
    %286 = vmatprep.mubr.f32.mxu0 0.0
    %287 = vmatmul.mubr.f32.gmra.mrb[0].mxu0 %v221
    %v288 = vpop.f32.mrb[0].mxu0
    %v289 = vadd.f32 0.0, %v288
    %v290 = vpop.f32.mrb[0].mxu0
    %291 = vdwg.mxu0
    %v292 = vmul.f32 %v179, %v289
    %v293 = vadd.f32 %v292, %v193
    %v294 = vmul.f32 %v289, 6.2831855
    %v295 = vand.u32 2147483647, %v294
    %vm296 = vcmp.le.f32.partialorder %v295, 0.7853982
    %vm297 = vcmp.lt.s32.totalorder %v294, 0
    %v298 = vand.u32 %v294, 2139095040
    %v299 = vshrl.u32 %v298, 23
    %v300 = vsub.s32 %v299, 127
    %v301 = vand.u32 2147483647, %v294
    %v302 = vand.u32 %v301, 8388607
    %v303 = vor.u32 %v302, 8388608
    %v304 = vsub.s32 0, %v303
    %v305 = vadd.s32 %v300, 1
    %vm306 = vcmp.gt.s32.totalorder %v305, 0
    %v307 = vsel %vm306, %v305, 0
    %v308 = vshrl.u32 %v307, 5
    %v309 = vand.u32 %v307, 31
    %v310 = vsub.s32 32, %v309
    %v311 = vshrl.u32 683565275, %v310
    %v312 = vshll.u32 683565275, %v309
    %v313 = vshrl.u32 2475754826, %v310
    %v314 = vor.u32 %v312, %v313
    %v315 = vshll.u32 2475754826, %v309
    %v316 = vshrl.u32 2131351028, %v310
    %v317 = vor.u32 %v315, %v316
    %v318 = vshll.u32 2131351028, %v309
    %v319 = vshrl.u32 2102212464, %v310
    %v320 = vor.u32 %v318, %v319
    %v321 = vshll.u32 2102212464, %v309
    %v322 = vshrl.u32 920167782, %v310
    %v323 = vor.u32 %v321, %v322
    %v324 = vshll.u32 920167782, %v309
    %v325 = vshrl.u32 1326507024, %v310
    %v326 = vor.u32 %v324, %v325
    %vm327 = vcmp.lt.s32.totalorder %v308, 1
    %vm328 = vcmp.lt.s32.totalorder %v308, 2
    %vm329 = vcmp.lt.s32.totalorder %v308, 3
    %vm330 = vcmp.lt.s32.totalorder %v308, 4
    %v331 = vsel %vm327, %v311, %v314
    %v332 = vsel %vm330, %v320, 2102212464
    %v333 = vsel %vm329, %v317, %v332
    %v334 = vsel %vm328, %v331, %v333
    %v335 = vsel %vm327, %v314, %v317
    %v336 = vsel %vm330, %v323, 920167782
    %v337 = vsel %vm329, %v320, %v336
    %v338 = vsel %vm328, %v335, %v337
    %v339 = vsel %vm327, %v317, %v320
    %v340 = vsel %vm330, %v326, 1326507024
    %v341 = vsel %vm329, %v323, %v340
    %v342 = vsel %vm328, %v339, %v341
    %v343 = vshll.u32 %v303, 8
    %v344 = vmul.u32.u64.compose %v343, %v342
    %v345 = vextract.low.u32 %v344
    %v346 = vextract.high.u32 %v344
    %v347 = vmul.u32.u64.compose %v343, %v338
    %v348 = vextract.low.u32 %v347
    %v349 = vextract.high.u32 %v347
    %v350 = vmul.u32 %v343, %v334
    %v351 = vadd.s32 %v346, %v348
    %vm352 = vc.u32 %v346, %v348
    %v353 = vadd.s32 %v349, 1
    %v354 = vsel %vm352, %v353, %v349
    %v355 = vadd.s32 %v350, %v354
    %v356 = vadd.s32 %v355, 536870912
    %v357 = vshrl.u32 %v356, 30
    %v358 = vshll.u32 %v357, 30
    %v359 = vsub.s32 %v355, %v358
    %vm360 = vcmp.lt.s32.totalorder %v359, 0
    %v361 = vsub.s32 0, %v359
    %v362 = vsel %vm360, %v361, %v359
    %v363 = vclz %v362
    %v364 = vsub.s32 %v363, 2
    %vm365 = vcmp.gt.s32.totalorder 0, %v364
    %v366 = vsel %vm365, 0, %v364
    %v367 = vsub.s32 32, %v366
    %v368 = vshll.u32 %v359, %v366
    %v369 = vshrl.u32 %v351, %v367
    %v370 = vor.u32 %v368, %v369
    %v371 = vsub.s32 4294967266, %v366
    %v372 = vadd.s32 %v371, 127
    %v373 = vshll.u32 %v372, 23
    %v374 = vor.u32 4788187, %v373
    %v375 = vand.u32 2147483647, %v374
    %v377 = vcvt.s32.f32 %v370
    %v378 = vmul.f32 %v377, %v375
    %v379 = vxor.u32 %v378, 2147483648
    %v380 = vsel %vm297, %v379, %v378
    %v381 = vsub.s32 4, %v357
    %v382 = vsel %vm297, %v381, %v357
    %v383 = vsel %vm296, %v294, %v380
    %v384 = vsel %vm296, 0, %v382
    %v385 = vcosq.f32.pop %v383
    %v386 = vsinq.f32.pop %v383
    %vm387 = vweird.f32 %v294
    %v388 = vadd.s32 %v384, 3
    %v389 = vand.u32 %v388, 3
    %vm390 = vcmp.lt.s32.totalorder %v389, 2
    %vm391 = vcmp.eq.s32.totalorder %v389, 0
    %v392 = vxor.u32 %v386, 2147483648
    %v393 = vsel %vm391, %v385, %v392
    %vm394 = vcmp.eq.s32.totalorder %v389, 2
    %v395 = vxor.u32 %v385, 2147483648
    %v396 = vsel %vm394, %v395, %v386
    %v397 = vsel %vm390, %v393, %v396
    %v398 = vsel %vm387, nan, %v397
    %v399 = vmul.f32 %v186, %v398
    %v400 = vadd.f32 %v293, %v399
    %401 = vst [vmem:[#allocation11] sm:$0xff] %v400
    // Predicated region
    $region46: #{tpu_custom_call.1} parent=1 // pred_check
      _
    $region47: #{tpu_custom_call.1} parent=1 // pred_check_branch
      %403 = sbr.rel (0) target = $region49
    $region48: #{tpu_custom_call.1} parent=1 // pred_region
      %s405 = ssub.s32 128, 128
      %406 = vsyncadd [#allocation5], %s405
      %s408 = sshll.u32 [#allocation11], 4
      %s409 = int_to_ptr.vmem [resolvable:$true] %s408
      %411 = dma.vmem_to_hbm [thread:$0]  %s409, 128, %s7, [#allocation5]
    $region49: #{tpu_custom_call.1} parent=1 // pred_fallthru
      _
    // Predicated region
    $region50: #{tpu_custom_call.1} parent=1 // pred_check
      _
    $region51: #{tpu_custom_call.1} parent=1 // pred_check_branch
      %413 = sbr.rel (0) target = $region53
    $region52: #{tpu_custom_call.1} parent=1 // pred_region
      %414 = dma.done [#allocation5], 128
    $region53: #{tpu_custom_call.1} parent=1 // pred_fallthru
      _
    %415 = vsyncpa [#allocation4], 1
    %416 = vsyncpa [#allocation7], 1
    %417 = vsyncpa [#allocation10], 1
    %418 = vsyncpa [#allocation5], 1

</llo_original>
